<compile_context>
chip_gen: v5e
topology: v5e:2x2
jax: 0.10.0
libtpu: 0.0.40
codegen_flags: <defaults>
</compile_context>

<pallas_src>
import functools

import numpy as np
import jax
import jax.numpy as jnp
from jax.experimental import pallas as pl
from jax.experimental.pallas import tpu as pltpu


# ------------------------------------------------------------------------------------------------
# pltpu.roll direction probe (run once, outside jit) so the kernel never depends on the convention.
# ------------------------------------------------------------------------------------------------
def _probe_roll_is_left():
    """True iff pltpu.roll(x, s, axis=-1)[..., p] == x[..., (p + s) % N] (a LEFT rotation)."""
    def k(x_ref, o_ref):
        o_ref[...] = pltpu.roll(x_ref[...], 1, axis=1)

    x = jnp.tile(jnp.arange(128, dtype=jnp.float32)[None, :], (8, 1))
    out = pl.pallas_call(k, out_shape=jax.ShapeDtypeStruct((8, 128), jnp.float32))(x)
    return bool(abs(float(out[0, 0]) - 1.0) < 0.5)


# ------------------------------------------------------------------------------------------------
# The fused SCFLM kernel: one grid step = one batch element, both modalities, end-to-end.
# ------------------------------------------------------------------------------------------------
def _scflm_kernel(xr_ref, xt_ref, w1t_ref, b1_ref, w2_ref, b2_ref,
                  w49_ref, bnb_ref, wc3_ref, mask9_ref, mask49_ref, mup_ref,
                  out_r_ref, out_t_ref, im2col_ref, *, C, H, W, roll_left):
    HW = H * W

    def lrot(a, r):
        """out[:, p] = a[:, (p + r) % HW] for a static integer r (XLU lane rotate)."""
        r = r % HW
        if r == 0:
            return a
        return pltpu.roll(a, r if roll_left else HW - r, axis=1)

    def sigmoid(v):
        # exp + approximate reciprocal both live on the EUP slot (no f32 VALU divide).
        return pl.reciprocal(1.0 + jnp.exp(-v), approx=True)

    x_refs = (xr_ref, xt_ref)

    # ---- ChannelGate (shared MLP over avg & max pools) + vote + ChannelPool, per modality ------
    votes = []
    comp_rows = []
    for m in range(2):
        xm = x_refs[m][0]                                         # (C, HW) lane-dense
        avg = jnp.mean(xm, axis=1, keepdims=True)                 # (C, 1)  avg-pool over HxW
        mx = jnp.max(xm, axis=1, keepdims=True)                   # (C, 1)  max-pool over HxW
        w1t = w1t_ref[m]                                          # (C, Cr)
        b1 = b1_ref[m]                                            # (1, Cr)
        # mlp(avg) + mlp(max): ReLU hidden per branch, second Linear applied once (linearity).
        h = (jnp.maximum(jnp.sum(w1t * avg, axis=0, keepdims=True) + b1, 0.0) +
             jnp.maximum(jnp.sum(w1t * mx, axis=0, keepdims=True) + b1, 0.0))        # (1, Cr)
        att = jnp.sum(w2_ref[m] * h, axis=1, keepdims=True) + 2.0 * b2_ref[m]          # (C, 1)
        vote = xm * sigmoid(att)                                  # (C, HW)  scale * x
        votes.append(vote)
        comp_rows.append(jnp.max(vote, axis=0, keepdims=True))    # ChannelPool max   (1, HW)
        comp_rows.append(jnp.mean(vote, axis=0, keepdims=True))   # ChannelPool mean  (1, HW)
    comp = jnp.concatenate(comp_rows, axis=0)                     # (4, HW): [r_max,r_mean,t_max,t_mean]

    # ---- CrossSpatialGate 7x7 conv (+folded BN) as 49 rotate+FMA taps on the XLU/VPU ----------
    conv_r = jnp.zeros((1, HW), jnp.float32)
    conv_t = jnp.zeros((1, HW), jnp.float32)
    for ky in range(7):
        for kx in range(7):
            tap = ky * 7 + kx
            rolled = lrot(comp, (ky - 3) * W + (kx - 3))
            if tap != 24:                                         # center tap: mask is all ones
                rolled = rolled * mask49_ref[tap:tap + 1, :]
            conv_r = conv_r + (w49_ref[tap] * rolled[0:1, :] +
                               w49_ref[49 + tap] * rolled[1:2, :])
            conv_t = conv_t + (w49_ref[98 + tap] * rolled[2:3, :] +
                               w49_ref[147 + tap] * rolled[3:4, :])
    scale_r = sigmoid(conv_r + bnb_ref[0])                        # (1, HW)
    scale_t = sigmoid(conv_t + bnb_ref[1])                        # (1, HW)

    aux_rgb = votes[1] * scale_r    # spatial_rgb(x1=vote_thermal, x2=vote_rgb)
    aux_th = votes[0] * scale_t     # spatial_thermal(x1=vote_rgb, x2=vote_thermal)

    # ---- early fuse: write aux + vote now so votes/aux die before the matmul section -----------
    out_r_ref[0] = aux_rgb + votes[0]
    out_t_ref[0] = aux_th + votes[1]

    # ---- 3x3 conv C -> 2C on aux_rgb: im2col staged in bf16 VMEM scratch, one K=9C MXU matmul --
    for ky in range(3):
        for kx in range(3):
            tap = ky * 3 + kx
            if tap == 4:                                          # center tap: mask is all ones
                tap_val = aux_rgb
            else:
                tap_val = lrot(aux_rgb, (ky - 1) * W + (kx - 1)) * mask9_ref[tap:tap + 1, :]
            im2col_ref[pl.ds(tap * C, C), :] = tap_val.astype(jnp.bfloat16)
    spatial = jnp.dot(wc3_ref[...], im2col_ref[...],
                      preferred_element_type=jnp.float32)         # (2C, HW) f32

    # ---- MaxPool2d(2) + AvgPool2d(2) -> bilinear upsample (align_corners=True) -> sigmoid ------
    r1 = lrot(spatial, 1)
    tmax = jnp.maximum(spatial, r1)
    tsum = spatial + r1
    pooled = (jnp.maximum(tmax, lrot(tmax, W)) +                  # 2x2 block max (valid @ even/even)
              0.25 * (tsum + lrot(tsum, W)))                      # + 2x2 block avg
    up = jnp.dot(pooled.astype(jnp.bfloat16), mup_ref[...],
                 preferred_element_type=jnp.float32)              # (2C, HW) upsampled max+avg
    sig = sigmoid(spatial + up)

    # ---- final fuse -----------------------------------------------------------------------------
    out_r_ref[0] = out_r_ref[0] + sig[:C, :]
    out_t_ref[0] = out_t_ref[0] + sig[C:, :]


# ------------------------------------------------------------------------------------------------
# Parameters (PyTorch-equivalent) + one-time host-side packing into kernel operands.
# ------------------------------------------------------------------------------------------------
def init_params(key, C, H, W, reduction_ratio=16):
    Cr = max(C // reduction_ratio, 1)
    ks = jax.random.split(key, 11)
    n = lambda k, shape, s: jax.random.normal(k, shape, jnp.float32) * s
    # BatchNorm2d(1) of the 7x7 BasicConv folded in eval mode: gamma=1, beta=0, mean=0, var=1
    bn_eval = jnp.array([1.0 / np.sqrt(1.0 + 1e-5), 0.0], jnp.float32)   # [scale, bias]
    return {
        "cg_rgb_w1": n(ks[0], (Cr, C), 0.1), "cg_rgb_b1": n(ks[1], (Cr,), 0.01),
        "cg_rgb_w2": n(ks[2], (C, Cr), 0.1), "cg_rgb_b2": n(ks[3], (C,), 0.01),
        "cg_th_w1": n(ks[4], (Cr, C), 0.1), "cg_th_b1": n(ks[5], (Cr,), 0.01),
        "cg_th_w2": n(ks[6], (C, Cr), 0.1), "cg_th_b2": n(ks[7], (C,), 0.01),
        "sp_rgb_w": n(ks[8], (2, 7, 7), 0.05), "sp_rgb_bn": bn_eval,
        "sp_th_w": n(ks[9], (2, 7, 7), 0.05), "sp_th_bn": bn_eval,
        "three_conv_w": n(ks[10], (2 * C, C, 3, 3), 0.05),
    }


def pack_params(params, H, W):
    """One-time host-side repacking of weights + structural operators (hoisted out of the jit)."""
    HW = H * W
    C = params["three_conv_w"].shape[1]
    ys, xs = np.divmod(np.arange(HW), W)

    def boundary_masks(k):
        half = (k - 1) // 2
        m = np.zeros((k * k, HW), np.float32)
        for ky in range(k):
            for kx in range(k):
                ok = ((ys + ky - half >= 0) & (ys + ky - half < H) &
                      (xs + kx - half >= 0) & (xs + kx - half < W))
                m[ky * k + kx] = ok.astype(np.float32)
        return m

    # bilinear upsample (align_corners=True) from the 2x2-pooled grid; reads only the even/even
    # lanes where the in-kernel pooling rotations leave the pooled values.
    def up_mat(out_size, in_size):
        U = np.zeros((out_size, in_size), np.float32)
        for i in range(out_size):
            src = i * (in_size - 1) / (out_size - 1) if out_size > 1 else 0.0
            lo = min(int(np.floor(src)), max(in_size - 2, 0))
            frac = src - lo
            U[i, lo] += 1.0 - frac
            U[i, min(lo + 1, in_size - 1)] += frac
        return U

    Uh, Uw = up_mat(H, H // 2), up_mat(W, W // 2)
    mupT = np.zeros((HW, HW), np.float32)
    for i in range(H // 2):
        for j in range(W // 2):
            mupT[(2 * i) * W + 2 * j, :] = np.kron(Uh[:, i], Uw[:, j])

    # 7x7 conv weights with BN scale folded, flattened (modality, in_channel, tap) for SMEM.
    w49 = jnp.stack([params["sp_rgb_w"] * params["sp_rgb_bn"][0],
                     params["sp_th_w"] * params["sp_th_bn"][0]]).reshape(-1)       # (196,)
    bn_bias = jnp.stack([params["sp_rgb_bn"][1], params["sp_th_bn"][1]])           # (2,)

    # 3x3 conv weight as (2C, 9C): rows = out channel, cols = (tap, in channel); bf16 for the MXU.
    wc3 = jnp.transpose(params["three_conv_w"], (0, 2, 3, 1)).reshape(2 * C, 9 * C)

    return {
        "w1t": jnp.stack([params["cg_rgb_w1"].T, params["cg_th_w1"].T]),           # (2, C, Cr)
        "b1": jnp.stack([params["cg_rgb_b1"], params["cg_th_b1"]])[:, None, :],    # (2, 1, Cr)
        "w2": jnp.stack([params["cg_rgb_w2"], params["cg_th_w2"]]),                # (2, C, Cr)
        "b2": jnp.stack([params["cg_rgb_b2"], params["cg_th_b2"]])[:, :, None],    # (2, C, 1)
        "w49": w49.astype(jnp.float32),
        "bn_bias": bn_bias.astype(jnp.float32),
        "wc3": wc3.astype(jnp.bfloat16),
        "mask9": jnp.asarray(boundary_masks(3)),
        "mask49": jnp.asarray(boundary_masks(7)),
        "mupT": jnp.asarray(mupT).astype(jnp.bfloat16),
    }


# ------------------------------------------------------------------------------------------------
# SCFLM forward: one pallas_call, grid=(B,), everything else fused inside the kernel.
# ------------------------------------------------------------------------------------------------
def scflm_forward(ops, modal_rgb, modal_thermal, *, roll_left):
    B, C, H, W = modal_rgb.shape
    HW = H * W
    Cr = ops["w1t"].shape[2]

    xr = modal_rgb.reshape(B, C, HW)
    xt = modal_thermal.reshape(B, C, HW)

    kernel = functools.partial(_scflm_kernel, C=C, H=H, W=W, roll_left=roll_left)
    full2 = lambda b: (0, 0)
    full3 = lambda b: (0, 0, 0)
    batch3 = lambda b: (b, 0, 0)
    smem = pl.BlockSpec(memory_space=pltpu.MemorySpace.SMEM)

    # Grid-invariant operands map to block (0, ...) every step, so they are not re-fetched across
    # grid iterations; their total footprint (~0.25 MiB) makes explicit single-buffering moot.
    out_r, out_t = pl.pallas_call(
        kernel,
        out_shape=(jax.ShapeDtypeStruct((B, C, HW), jnp.float32),
                   jax.ShapeDtypeStruct((B, C, HW), jnp.float32)),
        grid=(B,),
        in_specs=[
            pl.BlockSpec((1, C, HW), batch3),         # modal_rgb (lane-dense)
            pl.BlockSpec((1, C, HW), batch3),         # modal_thermal
            pl.BlockSpec((2, C, Cr), full3),          # ChannelGate W1^T (both modalities)
            pl.BlockSpec((2, 1, Cr), full3),          # ChannelGate b1
            pl.BlockSpec((2, C, Cr), full3),          # ChannelGate W2
            pl.BlockSpec((2, C, 1), full3),           # ChannelGate b2
            smem,                                     # 7x7 conv weights (196,) SMEM scalars
            smem,                                     # folded BN biases (2,)   SMEM scalars
            pl.BlockSpec((2 * C, 9 * C), full2),      # 3x3 conv weight (bf16)
            pl.BlockSpec((9, HW), full2),             # 3x3 boundary masks
            pl.BlockSpec((49, HW), full2),            # 7x7 boundary masks
            pl.BlockSpec((HW, HW), full2),            # pooled-grid -> bilinear upsample op (bf16)
        ],
        out_specs=(pl.BlockSpec((1, C, HW), batch3),
                   pl.BlockSpec((1, C, HW), batch3)),
        scratch_shapes=[pltpu.VMEM((9 * C, HW), jnp.bfloat16)],    # im2col staging
        compiler_params=pltpu.CompilerParams(dimension_semantics=("parallel",)),
    )(xr, xt, ops["w1t"], ops["b1"], ops["w2"], ops["b2"],
      ops["w49"], ops["bn_bias"], ops["wc3"], ops["mask9"], ops["mask49"], ops["mupT"])

    return out_r.reshape(B, C, H, W), out_t.reshape(B, C, H, W)


if __name__ == "__main__":
    B, C, H, W = 2, 32, 16, 16
    key = jax.random.PRNGKey(0)
    kp, k1, k2 = jax.random.split(key, 3)
    params = init_params(kp, C, H, W, reduction_ratio=16)
    ops = pack_params(params, H, W)              # one-time operator construction (outside jit)
    modal_rgb = jax.random.normal(k1, (B, C, H, W), jnp.float32)
    modal_thermal = jax.random.normal(k2, (B, C, H, W), jnp.float32)

    roll_left = _probe_roll_is_left()
    fwd = jax.jit(functools.partial(scflm_forward, roll_left=roll_left))
    out_rgb, out_th = fwd(ops, modal_rgb, modal_thermal)
    jax.block_until_ready((out_rgb, out_th))

    assert out_rgb.shape == (B, C, H, W) and out_th.shape == (B, C, H, W)
    assert bool(jnp.all(jnp.isfinite(out_rgb))) and bool(jnp.all(jnp.isfinite(out_th)))
    print("KERNEL_OK")
</pallas_src>

<mosaic_0001>
module attributes {stable_mosaic.version = 11 : i64} {
  func.func @k(%arg0: memref<8x128xf32, #tpu.memory_space<vmem>>, %arg1: memref<8x128xf32, #tpu.memory_space<vmem>>) attributes {dimension_semantics = [], scalar_prefetch = 0 : i64, scratch_operands = 0 : i64, tpu.core_type = #tpu.core_type<tc>} {
    %c0 = arith.constant 0 : index
    %c0_0 = arith.constant 0 : index
    %0 = vector.load %arg0[%c0, %c0_0] : memref<8x128xf32, #tpu.memory_space<vmem>>, vector<8x128xf32>
    %c1_i32 = arith.constant 1 : i32
    %1 = tpu.dynamic_rotate %0 by %c1_i32 dim 1 : vector<8x128xf32>, i32 -> vector<8x128xf32>
    %c0_1 = arith.constant 0 : index
    %c0_2 = arith.constant 0 : index
    %2 = vector.load %arg1[%c0_1, %c0_2] : memref<8x128xf32, #tpu.memory_space<vmem>>, vector<8x128xf32>
    tpu.vector_store %arg1[%c0_1, %c0_2], %1 {strides = array<i32>} : memref<8x128xf32, #tpu.memory_space<vmem>>, vector<8x128xf32>,
    return
  }
}

</mosaic_0001>

<llo_original>
// kernel: tpu_custom_call.1
$region0: #{tpu_custom_call.1}
  #allocation0 [shape = 'u32[]', space=smem, size = 0x4, offset = 0x4, fixed_abs, tag = 'smem constant byte address 0x4 - core index']
  #allocation1 [shape = 'u32[72,128]{1,0:T(1,128)}', space=vmem, size = 0x9000, scoped, tag = 'internal scratch']
  %s0 = inlined_call_operand.hbm [shape: f32[8,128], index: 0, kind: input, shape index: {}]
  %s1 = inlined_call_operand.hbm [shape: f32[8,128], index: 1, kind: output, shape index: {}]
  %s2 = sld [smem:[#allocation0]]
  $region18: #{tpu_custom_call.1} parent=0
    _
  %s4 = ssub.s32 1, %s2
  %s5 = scalar_select 0, %s4, %s2
  $region1: #{tpu_custom_call.1} parent=0
    #allocation2 [shape = 'u8[4096]{0}', space=vmem, size = 0x1000, scoped, tag = 'input window, operand 0, single buffered']
    #allocation3 [shape = 's32[1]{0}', space=sflag, size = 0x4, scoped, tag = 'scoped memory for tpu_custom_call.1']
    #allocation4 [shape = 's32[1]{0}', space=sflag, size = 0x4, scoped, tag = 'scoped memory for tpu_custom_call.1']
    #allocation5 [shape = 'u8[4096]{0}', space=vmem, size = 0x1000, scoped, tag = 'output window, operand 0, single buffered']
    %6 = vsyncpa [#allocation3], 0
    %7 = vsyncpa [#allocation4], 0
    // Predicated region
    $region2: #{tpu_custom_call.1} parent=1 // pred_check
      _
    $region3: #{tpu_custom_call.1} parent=1 // pred_check_branch
      %9 = sbr.rel (0) target = $region5
    $region4: #{tpu_custom_call.1} parent=1 // pred_region
      %11 = vsyncadd [#allocation3], 0
      %s13 = sshll.u32 %s0, 4
      %s14 = int_to_ptr.hbm [resolvable:$true] %s13
      %s15 = sshll.u32 [#allocation2], 4
      %s16 = int_to_ptr.vmem [resolvable:$true] %s15
      %18 = dma.hbm_to_vmem [thread:$0]  %s14, 128, %s16, [#allocation3]
    $region5: #{tpu_custom_call.1} parent=1 // pred_fallthru
      _
    // Predicated region
    $region6: #{tpu_custom_call.1} parent=1 // pred_check
      _
    $region7: #{tpu_custom_call.1} parent=1 // pred_check_branch
      %20 = sbr.rel (0) target = $region9
    $region8: #{tpu_custom_call.1} parent=1 // pred_region
      %22 = dma.done [#allocation3], 128
    $region9: #{tpu_custom_call.1} parent=1 // pred_fallthru
      _
    %v23 = vld [vmem:[#allocation2] sm:$0xff]
    %24 = vrot.lane.b32.xlu0 %v23, 1
    %v25 = vpop.permute.xlu0 %24
    %26 = vst [vmem:[#allocation5] sm:$0xff] %v25
    // Predicated region
    $region10: #{tpu_custom_call.1} parent=1 // pred_check
      _
    $region11: #{tpu_custom_call.1} parent=1 // pred_check_branch
      %28 = sbr.rel (0) target = $region13
    $region12: #{tpu_custom_call.1} parent=1 // pred_region
      %30 = vsyncadd [#allocation4], 0
      %s32 = sshll.u32 [#allocation5], 4
      %s33 = int_to_ptr.vmem [resolvable:$true] %s32
      %s34 = sshll.u32 %s1, 4
      %s35 = int_to_ptr.hbm [resolvable:$true] %s34
      %37 = dma.vmem_to_hbm [thread:$0]  %s33, 128, %s35, [#allocation4]
    $region13: #{tpu_custom_call.1} parent=1 // pred_fallthru
      _
    // Predicated region
    $region14: #{tpu_custom_call.1} parent=1 // pred_check
      _
    $region15: #{tpu_custom_call.1} parent=1 // pred_check_branch
      %39 = sbr.rel (0) target = $region17
    $region16: #{tpu_custom_call.1} parent=1 // pred_region
      %41 = dma.done [#allocation4], 128
    $region17: #{tpu_custom_call.1} parent=1 // pred_fallthru
      _
    %42 = vsyncpa [#allocation3], 1
    %43 = vsyncpa [#allocation4], 1

</llo_original>
